<compile_context>
chip_gen: v5e
topology: v5e:2x2
jax: 0.10.0
libtpu: 0.0.40
codegen_flags: <defaults>
</compile_context>

<pallas_src>
import functools

import jax
import jax.numpy as jnp
from jax.experimental import pallas as pl
from jax.experimental.pallas import tpu as pltpu


def _round_up(x, m):
    return ((x + m - 1) // m) * m


def _relation_kernel(x_ref, w1_ref, b1_ref, w2_ref, b2_ref, w3_ref, b3_ref,
                     o_ref):
    # x_ref : (Cin, tile_p) compute dtype (bf16 by default)
    # w1_ref: (mid, Cin)  BN-scale-folded weights
    # w2_ref: (mid, mid)
    # w3_ref: (1, mid)
    # b1/b2 : (mid, 1) f32 shifts; b3_ref: (1,) f32 scalar in SMEM
    cd = w1_ref.dtype

    # layer1: (mid, Cin) @ (Cin, tile_p) -> (mid, tile_p), f32 accumulation
    h = jnp.dot(w1_ref[...], x_ref[...], preferred_element_type=jnp.float32)
    h = jnp.maximum(h + b1_ref[...], 0.0)

    # layer2: (mid, mid) @ (mid, tile_p)
    h = jnp.dot(w2_ref[...], h.astype(cd), preferred_element_type=jnp.float32)
    h = jnp.maximum(h + b2_ref[...], 0.0)

    # layer3: (1, mid) @ (mid, tile_p) -> lane-dense (1, tile_p) result
    o = jnp.dot(w3_ref[...], h.astype(cd), preferred_element_type=jnp.float32)
    o_ref[...] = (o + b3_ref[0]).astype(o_ref.dtype)


@functools.partial(jax.jit, static_argnames=("tile_p",))
def relation_net_patch_pallas(x_nchw, folded_params, *, tile_p=512):
    """x_nchw: (N, Cin, H, W). Returns (N, 1, H, W) float32."""
    w1, b1, w2, b2, w3, b3 = folded_params
    N, Cin, H, W = x_nchw.shape
    HW = H * W

    # Pixel tile: multiple of 128, capped so we don't over-pad tiny inputs.
    tile_p = _round_up(max(int(tile_p), 128), 128)
    tile_p = min(tile_p, _round_up(HW, 128))
    HW_pad = _round_up(HW, tile_p)

    compute_dtype = w1.dtype
    # Free reshape (NCHW -> (N, Cin, HW)); in a real pipeline x would already
    # be bf16 so this cast disappears.
    x = x_nchw.reshape(N, Cin, HW).astype(compute_dtype)
    if HW_pad != HW:
        x = jnp.pad(x, ((0, 0), (0, 0), (0, HW_pad - HW)))

    grid = (N, HW_pad // tile_p)

    out = pl.pallas_call(
        _relation_kernel,
        out_shape=jax.ShapeDtypeStruct((N, 1, HW_pad), jnp.float32),
        grid=grid,
        in_specs=[
            # (Cin, tile_p) pixel tile: channels on sublanes, pixels on lanes.
            pl.BlockSpec((pl.Squeezed(), Cin, tile_p), lambda n, p: (n, 0, p)),
            pl.BlockSpec(w1.shape, lambda n, p: (0, 0)),
            pl.BlockSpec(b1.shape, lambda n, p: (0, 0)),
            pl.BlockSpec(w2.shape, lambda n, p: (0, 0)),
            pl.BlockSpec(b2.shape, lambda n, p: (0, 0)),
            pl.BlockSpec(w3.shape, lambda n, p: (0, 0)),
            # b3 is a true scalar -> SMEM, no VMEM tile / broadcast needed.
            pl.BlockSpec(memory_space=pltpu.MemorySpace.SMEM),
        ],
        out_specs=pl.BlockSpec((pl.Squeezed(), 1, tile_p),
                               lambda n, p: (n, 0, p)),
        compiler_params=pltpu.CompilerParams(
            dimension_semantics=("parallel", "parallel")),
    )(x, w1, b1, w2, b2, w3, b3)

    # Drop pixel padding; reshape back to NCHW (free).
    return out[:, :, :HW].reshape(N, 1, H, W)


def make_torch_style_params(key, in_channels, middle_dim):
    """Random params in PyTorch layout: conv weights (Cout, Cin), BN stats."""
    ks = jax.random.split(key, 14)
    p = {
        "w1": 0.1 * jax.random.normal(ks[0], (middle_dim, in_channels), jnp.float32),
        "b1": 0.1 * jax.random.normal(ks[1], (middle_dim,), jnp.float32),
        "g1": 1.0 + 0.1 * jax.random.normal(ks[2], (middle_dim,), jnp.float32),
        "beta1": 0.1 * jax.random.normal(ks[3], (middle_dim,), jnp.float32),
        "m1": 0.05 * jax.random.normal(ks[4], (middle_dim,), jnp.float32),
        "v1": 1.0 + 0.1 * jax.random.uniform(ks[5], (middle_dim,), jnp.float32),
        "w2": 0.1 * jax.random.normal(ks[6], (middle_dim, middle_dim), jnp.float32),
        "b2": 0.1 * jax.random.normal(ks[7], (middle_dim,), jnp.float32),
        "g2": 1.0 + 0.1 * jax.random.normal(ks[8], (middle_dim,), jnp.float32),
        "beta2": 0.1 * jax.random.normal(ks[9], (middle_dim,), jnp.float32),
        "m2": 0.05 * jax.random.normal(ks[10], (middle_dim,), jnp.float32),
        "v2": 1.0 + 0.1 * jax.random.uniform(ks[11], (middle_dim,), jnp.float32),
        "w3": 0.1 * jax.random.normal(ks[12], (1, middle_dim), jnp.float32),
        "b3": 0.1 * jax.random.normal(ks[13], (1,), jnp.float32),
    }
    return p


def fold_params(p, compute_dtype=jnp.bfloat16, eps=1e-5):
    """Fold eval-mode BN scale into conv weights; bias+BN shift into per-channel shift."""
    s1 = p["g1"] / jnp.sqrt(p["v1"] + eps)
    w1 = (p["w1"] * s1[:, None]).astype(compute_dtype)                 # (mid, Cin)
    b1 = (s1 * (p["b1"] - p["m1"]) + p["beta1"]).reshape(-1, 1).astype(jnp.float32)

    s2 = p["g2"] / jnp.sqrt(p["v2"] + eps)
    w2 = (p["w2"] * s2[:, None]).astype(compute_dtype)                 # (mid, mid)
    b2 = (s2 * (p["b2"] - p["m2"]) + p["beta2"]).reshape(-1, 1).astype(jnp.float32)

    w3 = p["w3"].astype(compute_dtype)                                 # (1, mid)
    b3 = p["b3"].astype(jnp.float32)                                   # (1,)
    return (w1, b1, w2, b2, w3, b3)


def reference_forward(x_nchw, p, eps=1e-5):
    """Pure-JAX f32 reference of the unfolded module (eval-mode BN)."""
    def conv1x1(x, w, b):
        return jnp.einsum("nchw,oc->nohw", x, w) + b[None, :, None, None]

    def bn(x, g, be, m, v):
        inv = g / jnp.sqrt(v + eps)
        return (x - m[None, :, None, None]) * inv[None, :, None, None] \
            + be[None, :, None, None]

    h = jnp.maximum(bn(conv1x1(x_nchw, p["w1"], p["b1"]),
                       p["g1"], p["beta1"], p["m1"], p["v1"]), 0.0)
    h = jnp.maximum(bn(conv1x1(h, p["w2"], p["b2"]),
                       p["g2"], p["beta2"], p["m2"], p["v2"]), 0.0)
    return conv1x1(h, p["w3"], p["b3"])


if __name__ == "__main__":
    # Module config (small): input_size=[4, 16, 16] -> conv1 in_channels = 4*2 = 8
    N, C, H, Wsp = 2, 4, 16, 16
    in_channels = 2 * C
    middle_dim = 32

    key = jax.random.PRNGKey(0)
    kx, kp = jax.random.split(key)
    x = jax.random.normal(kx, (N, in_channels, H, Wsp), jnp.float32)  # NCHW
    torch_params = make_torch_style_params(kp, in_channels, middle_dim)

    folded = fold_params(torch_params, compute_dtype=jnp.bfloat16)
    out = relation_net_patch_pallas(x, folded)
    out = jax.block_until_ready(out)

    ref = reference_forward(x, torch_params)
    assert out.shape == (N, 1, H, Wsp)
    # bf16 matmul operands -> loosened tolerance (f32 accumulation + epilogue).
    assert jnp.allclose(out, ref, atol=2e-2, rtol=2e-2), \
        float(jnp.max(jnp.abs(out - ref)))
    print("KERNEL_OK")
</pallas_src>

<mosaic_0001>
module attributes {stable_mosaic.version = 11 : i64} {
  func.func @_relation_kernel(%arg0: i32, %arg1: i32, %arg2: memref<1x8x256xbf16, #tpu.memory_space<vmem>>, %arg3: memref<32x8xbf16, #tpu.memory_space<vmem>>, %arg4: memref<32x1xf32, #tpu.memory_space<vmem>>, %arg5: memref<32x32xbf16, #tpu.memory_space<vmem>>, %arg6: memref<32x1xf32, #tpu.memory_space<vmem>>, %arg7: memref<1x32xbf16, #tpu.memory_space<vmem>>, %arg8: memref<1xf32, #tpu.memory_space<smem>>, %arg9: memref<1x1x256xf32, #tpu.memory_space<vmem>>) attributes {dimension_semantics = [#tpu.dimension_semantics<parallel>, #tpu.dimension_semantics<parallel>], iteration_bounds = array<i64: 2, 1>, scalar_prefetch = 0 : i64, scratch_operands = 0 : i64, tpu.core_type = #tpu.core_type<tc>, window_params = [{transform_indices = @transform_0, window_bounds = array<i64: 1, 8, 256>}, {pipeline_mode = #tpu.pipeline_mode<synchronous>, transform_indices = @transform_1, window_bounds = array<i64: 32, 8>}, {pipeline_mode = #tpu.pipeline_mode<synchronous>, transform_indices = @transform_2, window_bounds = array<i64: 32, 1>}, {pipeline_mode = #tpu.pipeline_mode<synchronous>, transform_indices = @transform_3, window_bounds = array<i64: 32, 32>}, {pipeline_mode = #tpu.pipeline_mode<synchronous>, transform_indices = @transform_4, window_bounds = array<i64: 32, 1>}, {pipeline_mode = #tpu.pipeline_mode<synchronous>, transform_indices = @transform_5, window_bounds = array<i64: 1, 32>}, {transform_indices = @transform_6, window_bounds = array<i64: 1>}, {transform_indices = @transform_7, window_bounds = array<i64: 1, 1, 256>}]} {
    %c0 = arith.constant 0 : index
    %c0_0 = arith.constant 0 : index
    %0 = vector.load %arg3[%c0, %c0_0] : memref<32x8xbf16, #tpu.memory_space<vmem>>, vector<32x8xbf16>
    %c0_1 = arith.constant 0 : index
    %c0_2 = arith.constant 0 : index
    %c0_3 = arith.constant 0 : index
    %1 = vector.load %arg2[%c0_1, %c0_2, %c0_3] : memref<1x8x256xbf16, #tpu.memory_space<vmem>>, vector<1x8x256xbf16>
    %2 = vector.shape_cast %1 : vector<1x8x256xbf16> to vector<8x256xbf16>
    %cst = arith.constant dense<0.000000e+00> : vector<32x256xf32>
    %3 = tpu.matmul %0, %2, %cst {dimension_numbers = #tpu.dot_dimension_numbers<[1], [0], [0], [1], [0, 0, 1, 1], [], []>} : vector<32x8xbf16>, vector<8x256xbf16>, vector<32x256xf32> -> vector<32x256xf32>
    %c0_4 = arith.constant 0 : index
    %c0_5 = arith.constant 0 : index
    %4 = vector.load %arg4[%c0_4, %c0_5] : memref<32x1xf32, #tpu.memory_space<vmem>>, vector<32x1xf32>
    %5 = vector.broadcast %4 : vector<32x1xf32> to vector<32x256xf32>
    %6 = arith.addf %3, %5 : vector<32x256xf32>
    %cst_6 = arith.constant 0.000000e+00 : f32
    %7 = vector.broadcast %cst_6 : f32 to vector<32x256xf32>
    %8 = arith.maximumf %6, %7 : vector<32x256xf32>
    %c0_7 = arith.constant 0 : index
    %c0_8 = arith.constant 0 : index
    %9 = vector.load %arg5[%c0_7, %c0_8] : memref<32x32xbf16, #tpu.memory_space<vmem>>, vector<32x32xbf16>
    %10 = arith.truncf %8 : vector<32x256xf32> to vector<32x256xbf16>
    %cst_9 = arith.constant dense<0.000000e+00> : vector<32x256xf32>
    %11 = tpu.matmul %9, %10, %cst_9 {dimension_numbers = #tpu.dot_dimension_numbers<[1], [0], [0], [1], [0, 0, 1, 1], [], []>} : vector<32x32xbf16>, vector<32x256xbf16>, vector<32x256xf32> -> vector<32x256xf32>
    %c0_10 = arith.constant 0 : index
    %c0_11 = arith.constant 0 : index
    %12 = vector.load %arg6[%c0_10, %c0_11] : memref<32x1xf32, #tpu.memory_space<vmem>>, vector<32x1xf32>
    %13 = vector.broadcast %12 : vector<32x1xf32> to vector<32x256xf32>
    %14 = arith.addf %11, %13 : vector<32x256xf32>
    %cst_12 = arith.constant 0.000000e+00 : f32
    %15 = vector.broadcast %cst_12 : f32 to vector<32x256xf32>
    %16 = arith.maximumf %14, %15 : vector<32x256xf32>
    %c0_13 = arith.constant 0 : index
    %c0_14 = arith.constant 0 : index
    %17 = vector.load %arg7[%c0_13, %c0_14] : memref<1x32xbf16, #tpu.memory_space<vmem>>, vector<1x32xbf16>
    %18 = arith.truncf %16 : vector<32x256xf32> to vector<32x256xbf16>
    %cst_15 = arith.constant dense<0.000000e+00> : vector<1x256xf32>
    %19 = tpu.matmul %17, %18, %cst_15 {dimension_numbers = #tpu.dot_dimension_numbers<[1], [0], [0], [1], [0, 0, 1, 1], [], []>} : vector<1x32xbf16>, vector<32x256xbf16>, vector<1x256xf32> -> vector<1x256xf32>
    %c0_16 = arith.constant 0 : index
    %20 = memref.load %arg8[%c0_16] : memref<1xf32, #tpu.memory_space<smem>>
    %21 = vector.broadcast %20 : f32 to vector<1x256xf32>
    %22 = arith.addf %19, %21 : vector<1x256xf32>
    %c0_17 = arith.constant 0 : index
    %c0_18 = arith.constant 0 : index
    %c0_19 = arith.constant 0 : index
    %23 = vector.load %arg9[%c0_17, %c0_18, %c0_19] : memref<1x1x256xf32, #tpu.memory_space<vmem>>, vector<1x1x256xf32>
    %24 = vector.shape_cast %23 : vector<1x1x256xf32> to vector<1x256xf32>
    %25 = vector.shape_cast %22 : vector<1x256xf32> to vector<1x1x256xf32>
    tpu.vector_store %arg9[%c0_17, %c0_18, %c0_19], %25 {strides = array<i32>} : memref<1x1x256xf32, #tpu.memory_space<vmem>>, vector<1x1x256xf32>,
    return
  }
  func.func @transform_0(%arg0: i32, %arg1: i32) -> (i32, i32, i32) {
    %c0_i32 = arith.constant 0 : i32
    %c0_i32_0 = arith.constant 0 : i32
    return %arg0, %c0_i32, %arg1 : i32, i32, i32
  }
  func.func @transform_1(%arg0: i32, %arg1: i32) -> (i32, i32) {
    %c0_i32 = arith.constant 0 : i32
    %c0_i32_0 = arith.constant 0 : i32
    %c0_i32_1 = arith.constant 0 : i32
    return %c0_i32, %c0_i32_0 : i32, i32
  }
  func.func @transform_2(%arg0: i32, %arg1: i32) -> (i32, i32) {
    %c0_i32 = arith.constant 0 : i32
    %c0_i32_0 = arith.constant 0 : i32
    %c0_i32_1 = arith.constant 0 : i32
    return %c0_i32, %c0_i32_0 : i32, i32
  }
  func.func @transform_3(%arg0: i32, %arg1: i32) -> (i32, i32) {
    %c0_i32 = arith.constant 0 : i32
    %c0_i32_0 = arith.constant 0 : i32
    %c0_i32_1 = arith.constant 0 : i32
    return %c0_i32, %c0_i32_0 : i32, i32
  }
  func.func @transform_4(%arg0: i32, %arg1: i32) -> (i32, i32) {
    %c0_i32 = arith.constant 0 : i32
    %c0_i32_0 = arith.constant 0 : i32
    %c0_i32_1 = arith.constant 0 : i32
    return %c0_i32, %c0_i32_0 : i32, i32
  }
  func.func @transform_5(%arg0: i32, %arg1: i32) -> (i32, i32) {
    %c0_i32 = arith.constant 0 : i32
    %c0_i32_0 = arith.constant 0 : i32
    %c0_i32_1 = arith.constant 0 : i32
    return %c0_i32, %c0_i32_0 : i32, i32
  }
  func.func @transform_6(%arg0: i32, %arg1: i32) -> i32 {
    %c0_i32 = arith.constant 0 : i32
    %c0_i32_0 = arith.constant 0 : i32
    return %c0_i32 : i32
  }
  func.func @transform_7(%arg0: i32, %arg1: i32) -> (i32, i32, i32) {
    %c0_i32 = arith.constant 0 : i32
    %c0_i32_0 = arith.constant 0 : i32
    return %arg0, %c0_i32, %arg1 : i32, i32, i32
  }
}

</mosaic_0001>

<llo_original>
// kernel: relation_net_patch_pallas.1
$region0: #{relation_net_patch_pallas.1}
  #allocation0 [shape = 'u32[]', space=smem, size = 0x4, offset = 0x4, fixed_abs, tag = 'smem constant byte address 0x4 - core index']
  #allocation1 [shape = 'u32[72,128]{1,0:T(1,128)}', space=vmem, size = 0x9000, scoped, tag = 'internal scratch']
  #allocation2 [shape = 'f32[1]{0:T(128)S(6)}', space=smem, size = 0x200, scoped, tag = 'scoped memory for relation_net_patch_pallas.1']
  %s0 = inlined_call_operand.vmem [shape: bf16[2,8,256], index: 0, kind: input, shape index: {}]
  %s1 = inlined_call_operand.vmem [shape: bf16[32,8], index: 1, kind: input, shape index: {}]
  %s2 = inlined_call_operand.vmem [shape: f32[32,1], index: 2, kind: input, shape index: {}]
  %s3 = inlined_call_operand.vmem [shape: bf16[32,32], index: 3, kind: input, shape index: {}]
  %s4 = inlined_call_operand.vmem [shape: f32[32,1], index: 4, kind: input, shape index: {}]
  %s5 = inlined_call_operand.vmem [shape: bf16[1,32], index: 5, kind: input, shape index: {}]
  %s6 = inlined_call_operand.<no memory space> [shape: f32[1], index: 6, kind: input, shape index: {}]
  %s7 = inlined_call_operand.vmem [shape: f32[2,1,256], index: 7, kind: output, shape index: {}]
  %s8 = sld [smem:[#allocation0]]
  $region61: #{relation_net_patch_pallas.1} parent=0
    _
  %s10 = ssub.s32 1, %s8
  %s11 = scalar_select 0, %s10, %s8
  %12 = sst [smem:[#allocation2]] %s6
  loop: start=0, step=1, limit=4
  $region2: #{relation_net_patch_pallas.1} parent=0 // loop_pre_header
    _
  $region3: #{relation_net_patch_pallas.1} parent=0 // loop_header
    %s14 = sphi 0, %s18
    %p15 = scmp.ge.s32.totalorder %s14, 4
    %s21 = sphi 0, %s33
    %s22 = sphi 0, %s29
    %s23 = sphi 0, %s21
    %s24 = sphi 0, %s22
    %s25 = sphi 0, %s23
    %s26 = sphi 0, %s24
    %s38 = sphi 0, %s40
    %s41 = sphi 0, %s38
    %s42 = sphi 0, %s41
    %s58 = sphi 0, %s42
    %s62 = sphi 0, %s62
    %s64 = sphi 0, %s62
    %s65 = sphi 0, %s64
    %s79 = sphi 0, %s65
    %s83 = sphi 0, %s83
    %s85 = sphi 0, %s83
    %s86 = sphi 0, %s85
    %s100 = sphi 0, %s86
    %s104 = sphi 0, %s104
    %s106 = sphi 0, %s104
    %s107 = sphi 0, %s106
    %s121 = sphi 0, %s107
    %s125 = sphi 0, %s125
    %s127 = sphi 0, %s125
    %s128 = sphi 0, %s127
    %s142 = sphi 0, %s128
    %s146 = sphi 0, %s146
    %s148 = sphi 0, %s146
    %s149 = sphi 0, %s148
    %s163 = sphi 0, %s149
    %s167 = sphi 0, %s167
    %s169 = sphi 0, %s167
    %s170 = sphi 0, %s169
    %s184 = sphi 0, %s170
    %s192 = sphi 0, %s194
    %s195 = sphi 0, %s192
    %s196 = sphi 0, %s195
    %s212 = sphi 0, %s196
  $region4: #{relation_net_patch_pallas.1} parent=0 // loop_header_branch
    %17 = sbr.rel (%p15) target = $region8
  $region5: #{relation_net_patch_pallas.1} parent=0 // loop_body
    %s19 = ssub.s32 %s14, 1
    %s20 = ssub.s32 %s14, 2
    %s27 = sadd.s32 1, %s22
    %p28 = scmp.ge.s32.totalorder %s27, 1
    %s29 = scalar_select %p28, 0, %s27
    %s30 = sadd.s32 1, %s21
    %s31 = scalar_select %p28, %s30, %s21
    %p32 = scmp.ge.s32.totalorder %s31, 2
    %s33 = scalar_select %p32, 0, %s31
    %s34 = ssub.s32 %s21, %s33
    %s35 = ssub.s32 %s22, %s29
    %s36 = sor.u32 %s34, %s35
    %p37 = scmp.eq.s32.totalorder %s36, 0
    %s39 = sadd.s32 %s38, 1
    %s40 = scalar_select %p37, %s38, %s39
    %p43 = pneg %p37
    %p44 = scmp.eq.s32.totalorder %s14, 1
    %p45 = por %p43, %p44
    %p46 = scmp.ne.s32.totalorder %s38, %s41
    %p47 = scmp.eq.s32.totalorder %s14, 0
    %p48 = por %p46, %p47
    %p49 = scmp.ne.s32.totalorder %s38, %s41
    %p50 = scmp.eq.s32.totalorder %s19, 1
    %p51 = por %p49, %p50
    %p52 = scmp.ne.s32.totalorder %s41, %s42
    %p53 = scmp.eq.s32.totalorder %s19, 0
    %p54 = por %p52, %p53
    %p55 = scmp.ne.s32.totalorder %s41, %s42
    %p56 = scmp.eq.s32.totalorder %s20, 1
    %p57 = por %p55, %p56
    %p59 = scmp.ne.s32.totalorder %s42, %s58
    %p60 = scmp.eq.s32.totalorder %s20, 0
    %p61 = por %p59, %p60
    %s63 = sadd.s32 %s62, 1
    %p66 = scmp.eq.s32.totalorder %s14, 1
    %p67 = scmp.ne.s32.totalorder %s62, %s64
    %p68 = scmp.eq.s32.totalorder %s14, 0
    %p69 = por %p67, %p68
    %p70 = scmp.ne.s32.totalorder %s62, %s64
    %p71 = scmp.eq.s32.totalorder %s19, 1
    %p72 = por %p70, %p71
    %p73 = scmp.ne.s32.totalorder %s64, %s65
    %p74 = scmp.eq.s32.totalorder %s19, 0
    %p75 = por %p73, %p74
    %p76 = scmp.ne.s32.totalorder %s64, %s65
    %p77 = scmp.eq.s32.totalorder %s20, 1
    %p78 = por %p76, %p77
    %p80 = scmp.ne.s32.totalorder %s65, %s79
    %p81 = scmp.eq.s32.totalorder %s20, 0
    %p82 = por %p80, %p81
    %s84 = sadd.s32 %s83, 1
    %p87 = scmp.eq.s32.totalorder %s14, 1
    %p88 = scmp.ne.s32.totalorder %s83, %s85
    %p89 = scmp.eq.s32.totalorder %s14, 0
    %p90 = por %p88, %p89
    %p91 = scmp.ne.s32.totalorder %s83, %s85
    %p92 = scmp.eq.s32.totalorder %s19, 1
    %p93 = por %p91, %p92
    %p94 = scmp.ne.s32.totalorder %s85, %s86
    %p95 = scmp.eq.s32.totalorder %s19, 0
    %p96 = por %p94, %p95
    %p97 = scmp.ne.s32.totalorder %s85, %s86
    %p98 = scmp.eq.s32.totalorder %s20, 1
    %p99 = por %p97, %p98
    %p101 = scmp.ne.s32.totalorder %s86, %s100
    %p102 = scmp.eq.s32.totalorder %s20, 0
    %p103 = por %p101, %p102
    %s105 = sadd.s32 %s104, 1
    %p108 = scmp.eq.s32.totalorder %s14, 1
    %p109 = scmp.ne.s32.totalorder %s104, %s106
    %p110 = scmp.eq.s32.totalorder %s14, 0
    %p111 = por %p109, %p110
    %p112 = scmp.ne.s32.totalorder %s104, %s106
    %p113 = scmp.eq.s32.totalorder %s19, 1
    %p114 = por %p112, %p113
    %p115 = scmp.ne.s32.totalorder %s106, %s107
    %p116 = scmp.eq.s32.totalorder %s19, 0
    %p117 = por %p115, %p116
    %p118 = scmp.ne.s32.totalorder %s106, %s107
    %p119 = scmp.eq.s32.totalorder %s20, 1
    %p120 = por %p118, %p119
    %p122 = scmp.ne.s32.totalorder %s107, %s121
    %p123 = scmp.eq.s32.totalorder %s20, 0
    %p124 = por %p122, %p123
    %s126 = sadd.s32 %s125, 1
    %p129 = scmp.eq.s32.totalorder %s14, 1
    %p130 = scmp.ne.s32.totalorder %s125, %s127
    %p131 = scmp.eq.s32.totalorder %s14, 0
    %p132 = por %p130, %p131
    %p133 = scmp.ne.s32.totalorder %s125, %s127
    %p134 = scmp.eq.s32.totalorder %s19, 1
    %p135 = por %p133, %p134
    %p136 = scmp.ne.s32.totalorder %s127, %s128
    %p137 = scmp.eq.s32.totalorder %s19, 0
    %p138 = por %p136, %p137
    %p139 = scmp.ne.s32.totalorder %s127, %s128
    %p140 = scmp.eq.s32.totalorder %s20, 1
    %p141 = por %p139, %p140
    %p143 = scmp.ne.s32.totalorder %s128, %s142
    %p144 = scmp.eq.s32.totalorder %s20, 0
    %p145 = por %p143, %p144
    %s147 = sadd.s32 %s146, 1
    %p150 = scmp.eq.s32.totalorder %s14, 1
    %p151 = scmp.ne.s32.totalorder %s146, %s148
    %p152 = scmp.eq.s32.totalorder %s14, 0
    %p153 = por %p151, %p152
    %p154 = scmp.ne.s32.totalorder %s146, %s148
    %p155 = scmp.eq.s32.totalorder %s19, 1
    %p156 = por %p154, %p155
    %p157 = scmp.ne.s32.totalorder %s148, %s149
    %p158 = scmp.eq.s32.totalorder %s19, 0
    %p159 = por %p157, %p158
    %p160 = scmp.ne.s32.totalorder %s148, %s149
    %p161 = scmp.eq.s32.totalorder %s20, 1
    %p162 = por %p160, %p161
    %p164 = scmp.ne.s32.totalorder %s149, %s163
    %p165 = scmp.eq.s32.totalorder %s20, 0
    %p166 = por %p164, %p165
    %s168 = sadd.s32 %s167, 1
    %p171 = scmp.eq.s32.totalorder %s14, 1
    %p172 = scmp.ne.s32.totalorder %s167, %s169
    %p173 = scmp.eq.s32.totalorder %s14, 0
    %p174 = por %p172, %p173
    %p175 = scmp.ne.s32.totalorder %s167, %s169
    %p176 = scmp.eq.s32.totalorder %s19, 1
    %p177 = por %p175, %p176
    %p178 = scmp.ne.s32.totalorder %s169, %s170
    %p179 = scmp.eq.s32.totalorder %s19, 0
    %p180 = por %p178, %p179
    %p181 = scmp.ne.s32.totalorder %s169, %s170
    %p182 = scmp.eq.s32.totalorder %s20, 1
    %p183 = por %p181, %p182
    %p185 = scmp.ne.s32.totalorder %s170, %s184
    %p186 = scmp.eq.s32.totalorder %s20, 0
    %p187 = por %p185, %p186
    %s188 = ssub.s32 %s21, %s33
    %s189 = ssub.s32 %s22, %s29
    %s190 = sor.u32 %s188, %s189
    %p191 = scmp.eq.s32.totalorder %s190, 0
    %s193 = sadd.s32 %s192, 1
    %s194 = scalar_select %p191, %s192, %s193
    %p197 = pneg %p191
    %p198 = scmp.eq.s32.totalorder %s14, 1
    %p199 = por %p197, %p198
    %p200 = scmp.ne.s32.totalorder %s192, %s195
    %p201 = scmp.eq.s32.totalorder %s14, 0
    %p202 = por %p200, %p201
    %p203 = scmp.ne.s32.totalorder %s192, %s195
    %p204 = scmp.eq.s32.totalorder %s19, 1
    %p205 = por %p203, %p204
    %p206 = scmp.ne.s32.totalorder %s195, %s196
    %p207 = scmp.eq.s32.totalorder %s19, 0
    %p208 = por %p206, %p207
    %p209 = scmp.ne.s32.totalorder %s195, %s196
    %p210 = scmp.eq.s32.totalorder %s20, 1
    %p211 = por %p209, %p210
    %p213 = scmp.ne.s32.totalorder %s196, %s212
    %p214 = scmp.eq.s32.totalorder %s20, 0
    %p215 = por %p213, %p214
    %p216 = scmp.le.s32.totalorder 1, %s14
    %p217 = scmp.lt.s32.totalorder %s14, 3
    %p218 = pnand %p216, %p217
    %p219 = pneg %p218
    // Predicated region
    $region9: #{relation_net_patch_pallas.1} parent=5 // pred_check
      _
    $region10: #{relation_net_patch_pallas.1} parent=5 // pred_check_branch
      %221 = sbr.rel (%p218) target = $region12
    $region11: #{relation_net_patch_pallas.1} parent=5 // pred_region
      %s222 = ssub.s32 %s14, 1
      // Predicated region
      $region13: #{relation_net_patch_pallas.1} parent=11 // pred_check
        %p223 = pneg %p75
      $region14: #{relation_net_patch_pallas.1} parent=11 // pred_check_branch
        %225 = sbr.rel (%p223) target = $region16
      $region15: #{relation_net_patch_pallas.1} parent=11 // pred_region
        _
      $region16: #{relation_net_patch_pallas.1} parent=11 // pred_fallthru
        _
      // Predicated region
      $region17: #{relation_net_patch_pallas.1} parent=11 // pred_check
        %p226 = pneg %p96
      $region18: #{relation_net_patch_pallas.1} parent=11 // pred_check_branch
        %228 = sbr.rel (%p226) target = $region20
      $region19: #{relation_net_patch_pallas.1} parent=11 // pred_region
        _
      $region20: #{relation_net_patch_pallas.1} parent=11 // pred_fallthru
        _
      // Predicated region
      $region21: #{relation_net_patch_pallas.1} parent=11 // pred_check
        %p229 = pneg %p117
      $region22: #{relation_net_patch_pallas.1} parent=11 // pred_check_branch
        %231 = sbr.rel (%p229) target = $region24
      $region23: #{relation_net_patch_pallas.1} parent=11 // pred_region
        _
      $region24: #{relation_net_patch_pallas.1} parent=11 // pred_fallthru
        _
      // Predicated region
      $region25: #{relation_net_patch_pallas.1} parent=11 // pred_check
        %p232 = pneg %p138
      $region26: #{relation_net_patch_pallas.1} parent=11 // pred_check_branch
        %234 = sbr.rel (%p232) target = $region28
      $region27: #{relation_net_patch_pallas.1} parent=11 // pred_region
        _
      $region28: #{relation_net_patch_pallas.1} parent=11 // pred_fallthru
        _
      // Predicated region
      $region29: #{relation_net_patch_pallas.1} parent=11 // pred_check
        %p235 = pneg %p159
      $region30: #{relation_net_patch_pallas.1} parent=11 // pred_check_branch
        %237 = sbr.rel (%p235) target = $region32
      $region31: #{relation_net_patch_pallas.1} parent=11 // pred_region
        _
      $region32: #{relation_net_patch_pallas.1} parent=11 // pred_fallthru
        _
      // Predicated region
      $region33: #{relation_net_patch_pallas.1} parent=11 // pred_check
        %p238 = pneg %p180
      $region34: #{relation_net_patch_pallas.1} parent=11 // pred_check_branch
        %240 = sbr.rel (%p238) target = $region36
      $region35: #{relation_net_patch_pallas.1} parent=11 // pred_region
        _
      $region36: #{relation_net_patch_pallas.1} parent=11 // pred_fallthru
        _
    $region12: #{relation_net_patch_pallas.1} parent=5 // pred_fallthru
      _
    %p241 = scmp.lt.s32.totalorder %s14, 2
    // Predicated region
    $region37: #{relation_net_patch_pallas.1} parent=5 // pred_check
      %p242 = pneg %p241
    $region38: #{relation_net_patch_pallas.1} parent=5 // pred_check_branch
      %244 = sbr.rel (%p242) target = $region40
    $region39: #{relation_net_patch_pallas.1} parent=5 // pred_region
      // Predicated region
      $region41: #{relation_net_patch_pallas.1} parent=39 // pred_check
        %p245 = pneg %p48
      $region42: #{relation_net_patch_pallas.1} parent=39 // pred_check_branch
        %247 = sbr.rel (%p245) target = $region44
      $region43: #{relation_net_patch_pallas.1} parent=39 // pred_region
        %s248 = smul.u32 2, %s22
        %p249 = scmp.lt.s32.totalorder %s21, 1
        %s250 = scalar_select %p249, %s21, 1
        %p251 = scmp.lt.s32.totalorder %s248, 1
        %s252 = scalar_select %p251, %s248, 1
        %s253 = smul.addr %s250, 2
        %s254 = sadd.s32 %s252, %s253
        %s255 = smul.addr %s254, 4
        %s256 = scalar_lea.vmem %s0, %s255
        %s257 = smul.u32 2, %s22
      $region44: #{relation_net_patch_pallas.1} parent=39 // pred_fallthru
        _
    $region40: #{relation_net_patch_pallas.1} parent=5 // pred_fallthru
      _
    %p258 = scmp.le.s32.totalorder 1, %s14
    %p259 = scmp.lt.s32.totalorder %s14, 3
    %p260 = pnand %p258, %p259
    %p261 = pneg %p260
    // Predicated region
    $region45: #{relation_net_patch_pallas.1} parent=5 // pred_check
      _
    $region46: #{relation_net_patch_pallas.1} parent=5 // pred_check_branch
      %263 = sbr.rel (%p260) target = $region48
    $region47: #{relation_net_patch_pallas.1} parent=5 // pred_region
      %s264 = ssub.s32 %s14, 1
      %s265 = smul.u32 2, %s24
      %p266 = scmp.lt.s32.totalorder %s23, 1
      %s267 = scalar_select %p266, %s23, 1
      %p268 = scmp.lt.s32.totalorder %s265, 1
      %s269 = scalar_select %p268, %s265, 1
      %s270 = smul.addr %s267, 2
      %s271 = sadd.s32 %s269, %s270
      %s272 = smul.addr %s271, 4
      %s273 = scalar_lea.vmem %s0, %s272
      %p274 = pneg %p54
      %p275 = pneg %p51
      %p276 = pneg %p75
      %p277 = pneg %p72
      %p278 = pneg %p96
      %p279 = pneg %p93
      %p280 = pneg %p117
      %p281 = pneg %p114
      %p282 = pneg %p138
      %p283 = pneg %p135
      %p284 = pneg %p159
      %p285 = pneg %p156
      %p286 = pneg %p180
      %p287 = pneg %p177
      %p288 = pneg %p208
      %p289 = pneg %p205
      %s290 = smul.u32 2, %s24
      %p291 = scmp.lt.s32.totalorder %s23, 1
      %s292 = scalar_select %p291, %s23, 1
      %p293 = scmp.lt.s32.totalorder %s290, 1
      %s294 = scalar_select %p293, %s290, 1
      %s295 = smul.addr %s292, 2
      %s296 = sadd.s32 %s294, %s295
      %s297 = scalar_lea.vmem %s7, %s296
      %s298 = smul.u32 2, %s24
      %p299 = scmp.lt.s32.totalorder %s23, 1
      %s300 = scalar_select %p299, %s23, 1
      %p301 = scmp.lt.s32.totalorder %s298, 1
      %s302 = scalar_select %p301, %s298, 1
      %s303 = smul.addr %s300, 2
      %s304 = sadd.s32 %s302, %s303
      %s305 = smul.addr %s304, 4
      %s306 = scalar_lea.vmem %s0, %s305
      %s307 = smul.u32 2, %s24
      %s308 = smul.u32 2, %s24
      %p309 = scmp.lt.s32.totalorder %s23, 1
      %s310 = scalar_select %p309, %s23, 1
      %p311 = scmp.lt.s32.totalorder %s308, 1
      %s312 = scalar_select %p311, %s308, 1
      %s313 = smul.addr %s310, 2
      %s314 = sadd.s32 %s312, %s313
      %s315 = scalar_lea.vmem %s7, %s314
      %s316 = smul.u32 2, %s24
      %v318 = vld [vmem:[%s1] sm:$0xf]
      %v319 = vld [vmem:[%s1 + $0x4] sm:$0xf]
      %v320 = vld [vmem:[%s1 + $0x8] sm:$0xf]
      %v321 = vld [vmem:[%s1 + $0xc] sm:$0xf]
      %v322 = vld [vmem:[%s306] sm:$0xff]
      %v323 = vld [vmem:[%s2] sm:$0xff]
      %v324 = vld [vmem:[%s2 + $0x8] sm:$0xff]
      %v325 = vld [vmem:[%s2 + $0x10] sm:$0xff]
      %v326 = vld [vmem:[%s2 + $0x18] sm:$0xff]
      %328 = vset.pattern.permute.xlu0 0
      %329 = vperm.xlu0 %328, %v323
      %v330 = vpop.permute.xlu0 %329
      %333 = vset.pattern.permute.xlu0 0
      %334 = vperm.xlu0 %333, %v324
      %v335 = vpop.permute.xlu0 %334
      %338 = vset.pattern.permute.xlu0 0
      %339 = vperm.xlu0 %338, %v325
      %v340 = vpop.permute.xlu0 %339
      %343 = vset.pattern.permute.xlu0 0
      %344 = vperm.xlu0 %343, %v326
      %v345 = vpop.permute.xlu0 %344
      %v351 = vunpack.c.l.b16 %v318
      %v352 = vunpack.c.l.b16 %v319
      %v353 = vunpack.c.l.b16 %v320
      %v354 = vunpack.c.l.b16 %v321
      %v355 = vpack.c.b16 %v352, %v351
      %v356 = vpack.c.b16 %v354, %v353
      %v358 = vunpack.c.l.b16 %v322
      %v359 = vunpack.c.h.b16 %v322
      %v360 = vpack.c.b16 %v358, %v358
      %v361 = vpack.c.b16 %v359, %v359
      %vm362 = vcmask 64512
      %v364 = vsel %vm362, %v355, 0
      %v367 = vsel %vm362, %v356, 0
      %vm369 = vcmask 1043456
      %v371 = vsel %vm369, %v360, 0
      %v374 = vsel %vm369, %v361, 0
      %376 = vmatpush.bf16.msra.mxu0 0
      %377 = vmatpush.bf16.msra.mxu0 0
      %378 = vmatpush.bf16.msra.mxu0 0
      %379 = vmatpush.bf16.msra.mxu0 0
      %380 = vmatpush.bf16.msra.mxu0 0
      %381 = vmatpush.bf16.msra.mxu0 0
      %382 = vmatpush.bf16.msra.mxu0 0
      %383 = vmatpush.bf16.msra.mxu0 %v371
      %384 = vmatmul.bf16.gmra.mxu0 %v364
      %v385 = vpop.f32.mrf.mxu0
      %v386 = vadd.f32 %v330, %v385
      %v387 = vpop.f32.mrf.mxu0
      %v388 = vadd.f32 %v335, %v387
      %389 = vmatmul.bf16.gmra.mxu0 %v367
      %v390 = vpop.f32.mrf.mxu0
      %v391 = vadd.f32 %v340, %v390
      %v392 = vpop.f32.mrf.mxu0
      %v393 = vadd.f32 %v345, %v392
      %394 = vdwg.mxu0
      %395 = vmatpush.bf16.msra.mxu0 0
      %396 = vmatpush.bf16.msra.mxu0 0
      %397 = vmatpush.bf16.msra.mxu0 0
      %398 = vmatpush.bf16.msra.mxu0 0
      %399 = vmatpush.bf16.msra.mxu0 0
      %400 = vmatpush.bf16.msra.mxu0 0
      %401 = vmatpush.bf16.msra.mxu0 0
      %402 = vmatpush.bf16.msra.mxu0 %v374
      %403 = vmatmul.bf16.gmra.mxu0 %v364
      %v404 = vpop.f32.mrf.mxu0
      %v405 = vadd.f32 %v330, %v404
      %v406 = vpop.f32.mrf.mxu0
      %v407 = vadd.f32 %v335, %v406
      %408 = vmatmul.bf16.gmra.mxu0 %v367
      %v409 = vpop.f32.mrf.mxu0
      %v410 = vadd.f32 %v340, %v409
      %v411 = vpop.f32.mrf.mxu0
      %v412 = vadd.f32 %v345, %v411
      %413 = vdwg.mxu0
      %v414 = vmax.f32 %v386, 0.0
      %v415 = vmax.f32 %v405, 0.0
      %v416 = vmax.f32 %v388, 0.0
      %v417 = vmax.f32 %v407, 0.0
      %v418 = vmax.f32 %v391, 0.0
      %v419 = vmax.f32 %v410, 0.0
      %v420 = vmax.f32 %v393, 0.0
      %v421 = vmax.f32 %v412, 0.0
      %v422 = vld [vmem:[%s3] sm:$0xf]
      %v423 = vld [vmem:[%s3 + $0x4] sm:$0xf]
      %v424 = vld [vmem:[%s3 + $0x8] sm:$0xf]
      %v425 = vld [vmem:[%s3 + $0xc] sm:$0xf]
      %v426 = vpack.c.bf16 %v416, %v414
      %v427 = vpack.c.bf16 %v417, %v415
      %v428 = vpack.c.bf16 %v420, %v418
      %v429 = vpack.c.bf16 %v421, %v419
      %v430 = vld [vmem:[%s4] sm:$0xff]
      %v431 = vld [vmem:[%s4 + $0x8] sm:$0xff]
      %v432 = vld [vmem:[%s4 + $0x10] sm:$0xff]
      %v433 = vld [vmem:[%s4 + $0x18] sm:$0xff]
      %435 = vset.pattern.permute.xlu0 0
      %436 = vperm.xlu0 %435, %v430
      %v437 = vpop.permute.xlu0 %436
      %440 = vset.pattern.permute.xlu0 0
      %441 = vperm.xlu0 %440, %v431
      %v442 = vpop.permute.xlu0 %441
      %445 = vset.pattern.permute.xlu0 0
      %446 = vperm.xlu0 %445, %v432
      %v447 = vpop.permute.xlu0 %446
      %450 = vset.pattern.permute.xlu0 0
      %451 = vperm.xlu0 %450, %v433
      %v452 = vpop.permute.xlu0 %451
      %v458 = vunpack.c.l.b16 %v422
      %v459 = vunpack.c.l.b16 %v423
      %v460 = vunpack.c.l.b16 %v424
      %v461 = vunpack.c.l.b16 %v425
      %v462 = vpack.c.b16 %v459, %v458
      %v463 = vpack.c.b16 %v461, %v460
      %vm464 = vcmask 261120
      %v466 = vsel %vm464, %v462, 0
      %v469 = vsel %vm464, %v463, 0
      %471 = vmatpush.bf16.msra.mxu0 0
      %472 = vmatpush.bf16.msra.mxu0 0
      %473 = vmatpush.bf16.msra.mxu0 0
      %474 = vmatpush.bf16.msra.mxu0 0
      %475 = vmatpush.bf16.msra.mxu0 0
      %476 = vmatpush.bf16.msra.mxu0 0
      %477 = vmatpush.bf16.msra.mxu0 %v428
      %478 = vmatpush.bf16.msra.mxu0 %v426
      %479 = vmatmul.bf16.gmra.mxu0 %v466
      %v480 = vpop.f32.mrf.mxu0
      %v481 = vadd.f32 %v437, %v480
      %v482 = vpop.f32.mrf.mxu0
      %v483 = vadd.f32 %v442, %v482
      %484 = vmatmul.bf16.gmra.mxu0 %v469
      %v485 = vpop.f32.mrf.mxu0
      %v486 = vadd.f32 %v447, %v485
      %v487 = vpop.f32.mrf.mxu0
      %v488 = vadd.f32 %v452, %v487
      %489 = vdwg.mxu0
      %490 = vmatpush.bf16.msra.mxu0 0
      %491 = vmatpush.bf16.msra.mxu0 0
      %492 = vmatpush.bf16.msra.mxu0 0
      %493 = vmatpush.bf16.msra.mxu0 0
      %494 = vmatpush.bf16.msra.mxu0 0
      %495 = vmatpush.bf16.msra.mxu0 0
      %496 = vmatpush.bf16.msra.mxu0 %v429
      %497 = vmatpush.bf16.msra.mxu0 %v427
      %498 = vmatmul.bf16.gmra.mxu0 %v466
      %v499 = vpop.f32.mrf.mxu0
      %v500 = vadd.f32 %v437, %v499
      %v501 = vpop.f32.mrf.mxu0
      %v502 = vadd.f32 %v442, %v501
      %503 = vmatmul.bf16.gmra.mxu0 %v469
      %v504 = vpop.f32.mrf.mxu0
      %v505 = vadd.f32 %v447, %v504
      %v506 = vpop.f32.mrf.mxu0
      %v507 = vadd.f32 %v452, %v506
      %508 = vdwg.mxu0
      %v509 = vmax.f32 %v481, 0.0
      %v510 = vmax.f32 %v500, 0.0
      %v511 = vmax.f32 %v483, 0.0
      %v512 = vmax.f32 %v502, 0.0
      %v513 = vmax.f32 %v486, 0.0
      %v514 = vmax.f32 %v505, 0.0
      %v515 = vmax.f32 %v488, 0.0
      %v516 = vmax.f32 %v507, 0.0
      %v517 = vld [vmem:[%s5] sm:$0x1]
      %v518 = vpack.c.bf16 %v511, %v509
      %v519 = vpack.c.bf16 %v512, %v510
      %v520 = vpack.c.bf16 %v515, %v513
      %v521 = vpack.c.bf16 %v516, %v514
      %s522 = sld [smem:[#allocation2]]
      %v523 = vstv %s522
      %v525 = vsel %vm464, %v517, 0
      %527 = vmatpush.bf16.msra.mxu0 0
      %528 = vmatpush.bf16.msra.mxu0 0
      %529 = vmatpush.bf16.msra.mxu0 0
      %530 = vmatpush.bf16.msra.mxu0 0
      %531 = vmatpush.bf16.msra.mxu0 0
      %532 = vmatpush.bf16.msra.mxu0 0
      %533 = vmatpush.bf16.msra.mxu0 %v520
      %534 = vmatpush.bf16.msra.mxu0 %v518
      %535 = vmatmul.bf16.gmra.mxu0 %v525
      %v536 = vpop.f32.mrf.mxu0
      %v537 = vadd.f32 %v523, %v536
      %v538 = vpop.f32.mrf.mxu0
      %539 = vdwg.mxu0
      %540 = vmatpush.bf16.msra.mxu0 0
      %541 = vmatpush.bf16.msra.mxu0 0
      %542 = vmatpush.bf16.msra.mxu0 0
      %543 = vmatpush.bf16.msra.mxu0 0
      %544 = vmatpush.bf16.msra.mxu0 0
      %545 = vmatpush.bf16.msra.mxu0 0
      %546 = vmatpush.bf16.msra.mxu0 %v521
      %547 = vmatpush.bf16.msra.mxu0 %v519
      %548 = vmatmul.bf16.gmra.mxu0 %v525
      %v549 = vpop.f32.mrf.mxu0
      %v550 = vadd.f32 %v523, %v549
      %v551 = vpop.f32.mrf.mxu0
      %552 = vdwg.mxu0
      %v555 = vrot.slane %v550, 7
      %vm556 = vcmask 1040384
      %v557 = vsel %vm556, %v537, %v555
      %v559 = vlaneseq
      %vm560 = vcmp.ge.s32.totalorder %v559, 0
      %vm561 = vcmp.lt.s32.totalorder %v559, 256
      %vm562 = vmand %vm560, %vm561
      %563 = vst.msk [vmem:[%s315] sm:$0x3] %vm562, %v557
      %s564 = smul.u32 2, %s24
      %p565 = scmp.lt.s32.totalorder %s23, 1
      %s566 = scalar_select %p565, %s23, 1
      %p567 = scmp.lt.s32.totalorder %s564, 1
      %s568 = scalar_select %p567, %s564, 1
      %s569 = smul.addr %s566, 2
      %s570 = sadd.s32 %s568, %s569
      %s571 = scalar_lea.vmem %s7, %s570
      // Predicated region
      $region49: #{relation_net_patch_pallas.1} parent=47 // pred_check
        %p572 = pneg %p205
      $region50: #{relation_net_patch_pallas.1} parent=47 // pred_check_branch
        %574 = sbr.rel (%p572) target = $region52
      $region51: #{relation_net_patch_pallas.1} parent=47 // pred_region
        %s575 = smul.u32 2, %s24
      $region52: #{relation_net_patch_pallas.1} parent=47 // pred_fallthru
        _
    $region48: #{relation_net_patch_pallas.1} parent=5 // pred_fallthru
      _
    %p576 = scmp.le.s32.totalorder 2, %s14
    // Predicated region
    $region53: #{relation_net_patch_pallas.1} parent=5 // pred_check
      %p577 = pneg %p576
    $region54: #{relation_net_patch_pallas.1} parent=5 // pred_check_branch
      %579 = sbr.rel (%p577) target = $region56
    $region55: #{relation_net_patch_pallas.1} parent=5 // pred_region
      %s580 = ssub.s32 %s14, 2
      // Predicated region
      $region57: #{relation_net_patch_pallas.1} parent=55 // pred_check
        %p581 = pneg %p211
      $region58: #{relation_net_patch_pallas.1} parent=55 // pred_check_branch
        %583 = sbr.rel (%p581) target = $region60
      $region59: #{relation_net_patch_pallas.1} parent=55 // pred_region
        %s584 = smul.u32 2, %s26
        %p585 = scmp.lt.s32.totalorder %s25, 1
        %s586 = scalar_select %p585, %s25, 1
        %p587 = scmp.lt.s32.totalorder %s584, 1
        %s588 = scalar_select %p587, %s584, 1
        %s589 = smul.addr %s586, 2
        %s590 = sadd.s32 %s588, %s589
        %s591 = scalar_lea.vmem %s7, %s590
      $region60: #{relation_net_patch_pallas.1} parent=55 // pred_fallthru
        _
    $region56: #{relation_net_patch_pallas.1} parent=5 // pred_fallthru
      _
  $region6: #{relation_net_patch_pallas.1} parent=0 // loop_footer
    %s18 = sadd.s32 1, %s14
  $region7: #{relation_net_patch_pallas.1} parent=0 // loop_footer_branch
    %13 = sbr.rel target = $region3
  $region8: #{relation_net_patch_pallas.1} parent=0 // loop_exit
    _

</llo_original>
